<compile_context>
chip_gen: v6e
topology: v6e:2x2x1
jax: 0.10.0
libtpu: 0.0.40
codegen_flags: <defaults>
</compile_context>

<pallas_src>
import jax
import jax.numpy as jnp
from jax.experimental import pallas as pl
from jax.experimental.pallas import tpu as pltpu


def _leaky_relu(x, slope=0.2):
    return jnp.where(x >= 0, x, slope * x)


def _round_up(x, m):
    return ((x + m - 1) // m) * m


_SINGLE_STEP_MAX = 8192     # <= this many rows: one grid step (DMA is tiny; skip step overhead)
_BLOCK_BATCH_CAP = 32768    # keeps f32 live temps ~<5 MiB: safe under v5e's 16 MiB scoped VMEM


def _choose_block_batch(batch):
    """Lane-aligned batch tile: single step when small, a few big steps when large."""
    b = _round_up(batch, 128)
    if b <= _SINGLE_STEP_MAX:
        return b
    # Large batch: as few steps as the VMEM cap allows, but >= 2 so both v7x
    # TensorCores are fed under dimension_semantics=("parallel",).
    steps = max(2, pl.cdiv(b, _BLOCK_BATCH_CAP))
    return _round_up(pl.cdiv(b, steps), 128)


def _vmem_limit_bytes(bb, u_dim, h1, h2, in_itemsize):
    """Explicit scoped-VMEM limit only when big tiles would overflow the 16 MiB default."""
    est = (2 * bb * (u_dim * in_itemsize + 4)                  # double-buffered r/out tiles
           + 2 * 4 * (h1 * u_dim + h1 + h2 * h1 + 2 * h2 + 1)  # (double-buffered) constants
           + 4 * bb * (u_dim + h1 + h2 + 1))                   # f32 live intermediates
    need = 2 * est + (4 << 20)                                 # headroom for spill/retile temps
    if need <= (16 << 20):     # fits every generation's scoped default (v5e is smallest)
        return None
    return min(need, 60 << 20)  # stay under v7x's 64 MiB physical VMEM


def push_disc_kernel(r_ref, w1_ref, b1_ref, w2_ref, b2_ref, w3_ref, b3_ref,
                     out_ref):
    """Fused 3-layer MLP forward for one batch tile (batch on the lane axis).

    r_ref : (u_dim, bb)   input tile, batch on lanes (f32 or bf16)
    w1    : (h1, u_dim)   same dtype as r (MXU consumes it directly)
    b1    : (h1, 1)       f32
    w2    : (h2, h1)      f32
    b2    : (h2, 1)       f32
    w3    : (h2, 1)       f32 final-layer weight as a column
    b3    : (1,) in SMEM  f32 scalar bias
    out   : (1, bb)       f32 lane-dense output slab
    """
    x = r_ref[...]                                   # no upcast: MXU eats bf16/f32 directly

    # Layer 1: (h1, u_dim) @ (u_dim, bb) -> (h1, bb) with f32 accumulation.
    h1 = jnp.dot(w1_ref[...], x, preferred_element_type=jnp.float32)
    h1 = _leaky_relu(h1 + b1_ref[...])

    # Layer 2: (h2, h1) @ (h1, bb) -> (h2, bb), f32.
    h2 = jnp.dot(w2_ref[...], h1, preferred_element_type=jnp.float32)
    h2 = _leaky_relu(h2 + b2_ref[...])

    # Output layer (h2 -> 1): VPU multiply + sublane reduce (no N=1 MXU matmul).
    out = jnp.sum(w3_ref[...] * h2, axis=0, keepdims=True) + b3_ref[0]

    out_ref[...] = out.astype(out_ref.dtype)


def push_discriminator_forward_t(r_t, params, *, block_batch=None):
    """PushDiscriminator forward on an already-transposed input.

    Primary contract: r_t has shape (u_dim, B) with batch on the trailing
    (lane) axis, already in the dtype it should be streamed from HBM in
    (float32 for parity with the fp32 PyTorch forward; bfloat16 to halve input
    bandwidth).  Producing r in this layout upstream avoids an extra HBM
    transpose pass.

    Returns: (B, 1) float32.
    """
    u_dim, B = r_t.shape
    w1, b1 = params["w1"], params["b1"]
    w2, b2 = params["w2"], params["b2"]
    w3, b3 = params["w3"], params["b3"]
    h1 = w1.shape[0]
    h2 = w2.shape[0]
    assert w1.shape == (h1, u_dim) and w2.shape == (h2, h1)
    assert w3.shape == (1, h2) and b1.shape == (h1,) and b2.shape == (h2,)

    bb = _choose_block_batch(B) if block_batch is None else int(block_batch)
    assert bb % 128 == 0, "block_batch must be a multiple of 128"
    padded_B = _round_up(B, bb)
    grid = (padded_B // bb,)

    if padded_B != B:   # zero-pad batch to the tile size; sliced off at the end
        r_t = jnp.pad(r_t, ((0, 0), (0, padded_B - B)))

    in_dtype = r_t.dtype
    itemsize = jnp.dtype(in_dtype).itemsize

    # Parameter plumbing (a few hundred bytes, once per call).
    w1c = w1.astype(in_dtype)                       # layer-1 weight in the streamed dtype
    w2c = w2.astype(jnp.float32)
    b1c = b1.reshape(h1, 1).astype(jnp.float32)
    b2c = b2.reshape(h2, 1).astype(jnp.float32)
    w3c = w3.reshape(h2, 1).astype(jnp.float32)     # column weight
    b3s = b3.reshape(1).astype(jnp.float32)         # SMEM scalar

    const = lambda shape: pl.BlockSpec(shape, lambda i: (0,) * len(shape))
    in_specs = [
        pl.BlockSpec((u_dim, bb), lambda i: (0, i)),        # r_t tile (lane-dense)
        const((h1, u_dim)),                                 # w1
        const((h1, 1)),                                     # b1
        const((h2, h1)),                                    # w2
        const((h2, 1)),                                     # b2
        const((h2, 1)),                                     # w3 column
        pl.BlockSpec(memory_space=pltpu.MemorySpace.SMEM),  # b3 scalar
    ]
    out_specs = pl.BlockSpec((1, bb), lambda i: (0, i))

    flops = 2 * padded_B * (u_dim * h1 + h1 * h2 + h2)
    bytes_accessed = (padded_B * u_dim * itemsize             # read r_t
                      + padded_B * 4                          # write out
                      + w1c.size * itemsize
                      + (h1 + w2c.size + h2 + h2 + 1) * 4)
    cost = pl.CostEstimate(flops=int(flops), transcendentals=0,
                           bytes_accessed=int(bytes_accessed))

    compiler_params = pltpu.CompilerParams(
        dimension_semantics=("parallel",),
        vmem_limit_bytes=_vmem_limit_bytes(bb, u_dim, h1, h2, itemsize),
    )

    out_t = pl.pallas_call(
        push_disc_kernel,
        out_shape=jax.ShapeDtypeStruct((1, padded_B), jnp.float32),
        grid_spec=pltpu.PrefetchScalarGridSpec(
            num_scalar_prefetch=0,
            grid=grid,
            in_specs=in_specs,
            out_specs=out_specs,
        ),
        compiler_params=compiler_params,
        cost_estimate=cost,
    )(r_t, w1c, b1c, w2c, b2c, w3c, b3s)

    # (1, padded_B) -> (B, 1): slice off padding; otherwise a pure reshape.
    return out_t[:, :B].reshape(B, 1)


def push_discriminator_forward(r, params, *, block_batch=None, input_dtype=None):
    """Module-layout convenience wrapper: r is (B, u_dim), as in the PyTorch forward.

    The transpose (+ optional downcast) here is a separate XLA pass over r; for
    large batches, produce r already as (u_dim, B) upstream and call
    `push_discriminator_forward_t` directly so the layout change is fused away.
    By default r keeps its own dtype (float32 => matches the fp32 PyTorch math);
    pass input_dtype=jnp.bfloat16 to halve HBM traffic at ~3-digit precision.
    """
    dtype = r.dtype if input_dtype is None else input_dtype
    r_t = jnp.transpose(r).astype(dtype)
    return push_discriminator_forward_t(r_t, params, block_batch=block_batch)


def init_params(key, u_dim, width_vec=None):
    """Parameters in PyTorch nn.Linear layout: w (out_features, in_features), b (out_features,).

    width_vec default = [u_dim, 16, 8]; the output layer maps width_vec[-1] -> 1.
    """
    if width_vec is None:
        width_vec = [u_dim, 16, 8]
    dims = list(width_vec) + [1]
    params = {}
    for li in range(len(dims) - 1):
        fan_in, fan_out = dims[li], dims[li + 1]
        key, kw, kb = jax.random.split(key, 3)
        bound = 1.0 / float(fan_in) ** 0.5
        params[f"w{li + 1}"] = jax.random.uniform(
            kw, (fan_out, fan_in), jnp.float32, minval=-bound, maxval=bound)
        params[f"b{li + 1}"] = jax.random.uniform(
            kb, (fan_out,), jnp.float32, minval=-bound, maxval=bound)
    return params


def reference_forward(r, params):
    """Pure-JAX reference of the PyTorch forward (for sanity checking)."""
    h = _leaky_relu(r @ params["w1"].T + params["b1"])
    h = _leaky_relu(h @ params["w2"].T + params["b2"])
    return h @ params["w3"].T + params["b3"]


if __name__ == "__main__":
    key = jax.random.PRNGKey(0)
    u_dim = 4
    kparam, k1, k2 = jax.random.split(key, 3)
    params = init_params(kparam, u_dim)                  # [u_dim, 16, 8] -> 1

    # Case 1: module-layout call, lane-aligned small batch (single grid step).
    r1 = jax.random.normal(k1, (256, u_dim), jnp.float32)
    out1 = jax.block_until_ready(push_discriminator_forward(r1, params))
    ref1 = reference_forward(r1, params)
    assert out1.shape == (256, 1)
    assert jnp.allclose(out1, ref1, atol=1e-4, rtol=1e-4), "mismatch (aligned batch)"

    # Case 2: transposed-contract call with a non-128-aligned batch; exercises
    # the zero-pad + slice path required for unaligned batches.
    r2 = jax.random.normal(k2, (200, u_dim), jnp.float32)
    out2 = jax.block_until_ready(
        push_discriminator_forward_t(jnp.transpose(r2), params))
    ref2 = reference_forward(r2, params)
    assert out2.shape == (200, 1)
    assert jnp.allclose(out2, ref2, atol=1e-4, rtol=1e-4), "mismatch (padded batch)"

    print("KERNEL_OK")
</pallas_src>

<mosaic_0001>
module attributes {stable_mosaic.version = 11 : i64} {
  func.func @push_disc_kernel(%arg0: i32, %arg1: memref<4x256xf32, #tpu.memory_space<vmem>>, %arg2: memref<16x4xf32, #tpu.memory_space<vmem>>, %arg3: memref<16x1xf32, #tpu.memory_space<vmem>>, %arg4: memref<8x16xf32, #tpu.memory_space<vmem>>, %arg5: memref<8x1xf32, #tpu.memory_space<vmem>>, %arg6: memref<8x1xf32, #tpu.memory_space<vmem>>, %arg7: memref<1xf32, #tpu.memory_space<smem>>, %arg8: memref<1x256xf32, #tpu.memory_space<vmem>>) attributes {dimension_semantics = [#tpu.dimension_semantics<parallel>], iteration_bounds = array<i64: 1>, scalar_prefetch = 0 : i64, scratch_operands = 0 : i64, tpu.core_type = #tpu.core_type<tc>, window_params = [{transform_indices = @transform_0, window_bounds = array<i64: 4, 256>}, {pipeline_mode = #tpu.pipeline_mode<synchronous>, transform_indices = @transform_1, window_bounds = array<i64: 16, 4>}, {pipeline_mode = #tpu.pipeline_mode<synchronous>, transform_indices = @transform_2, window_bounds = array<i64: 16, 1>}, {pipeline_mode = #tpu.pipeline_mode<synchronous>, transform_indices = @transform_3, window_bounds = array<i64: 8, 16>}, {pipeline_mode = #tpu.pipeline_mode<synchronous>, transform_indices = @transform_4, window_bounds = array<i64: 8, 1>}, {pipeline_mode = #tpu.pipeline_mode<synchronous>, transform_indices = @transform_5, window_bounds = array<i64: 8, 1>}, {transform_indices = @transform_6, window_bounds = array<i64: 1>}, {transform_indices = @transform_7, window_bounds = array<i64: 1, 256>}]} {
    %c0 = arith.constant 0 : index
    %c0_0 = arith.constant 0 : index
    %0 = vector.load %arg1[%c0, %c0_0] : memref<4x256xf32, #tpu.memory_space<vmem>>, vector<4x256xf32>
    %c0_1 = arith.constant 0 : index
    %c0_2 = arith.constant 0 : index
    %1 = vector.load %arg2[%c0_1, %c0_2] : memref<16x4xf32, #tpu.memory_space<vmem>>, vector<16x4xf32>
    %cst = arith.constant dense<0.000000e+00> : vector<16x256xf32>
    %2 = tpu.matmul %1, %0, %cst {dimension_numbers = #tpu.dot_dimension_numbers<[1], [0], [0], [1], [0, 0, 1, 1], [], []>} : vector<16x4xf32>, vector<4x256xf32>, vector<16x256xf32> -> vector<16x256xf32>
    %c0_3 = arith.constant 0 : index
    %c0_4 = arith.constant 0 : index
    %3 = vector.load %arg3[%c0_3, %c0_4] : memref<16x1xf32, #tpu.memory_space<vmem>>, vector<16x1xf32>
    %4 = vector.broadcast %3 : vector<16x1xf32> to vector<16x256xf32>
    %5 = arith.addf %2, %4 : vector<16x256xf32>
    %cst_5 = arith.constant 0.000000e+00 : f32
    %6 = vector.broadcast %cst_5 : f32 to vector<16x256xf32>
    %7 = arith.cmpf oge, %5, %6 : vector<16x256xf32>
    %cst_6 = arith.constant 2.000000e-01 : f32
    %8 = vector.broadcast %cst_6 : f32 to vector<16x256xf32>
    %9 = arith.mulf %8, %5 : vector<16x256xf32>
    %10 = arith.select %7, %5, %9 : vector<16x256xi1>, vector<16x256xf32>
    %c0_7 = arith.constant 0 : index
    %c0_8 = arith.constant 0 : index
    %11 = vector.load %arg4[%c0_7, %c0_8] : memref<8x16xf32, #tpu.memory_space<vmem>>, vector<8x16xf32>
    %cst_9 = arith.constant dense<0.000000e+00> : vector<8x256xf32>
    %12 = tpu.matmul %11, %10, %cst_9 {dimension_numbers = #tpu.dot_dimension_numbers<[1], [0], [0], [1], [0, 0, 1, 1], [], []>} : vector<8x16xf32>, vector<16x256xf32>, vector<8x256xf32> -> vector<8x256xf32>
    %c0_10 = arith.constant 0 : index
    %c0_11 = arith.constant 0 : index
    %13 = vector.load %arg5[%c0_10, %c0_11] : memref<8x1xf32, #tpu.memory_space<vmem>>, vector<8x1xf32>
    %14 = vector.broadcast %13 : vector<8x1xf32> to vector<8x256xf32>
    %15 = arith.addf %12, %14 : vector<8x256xf32>
    %cst_12 = arith.constant 0.000000e+00 : f32
    %16 = vector.broadcast %cst_12 : f32 to vector<8x256xf32>
    %17 = arith.cmpf oge, %15, %16 : vector<8x256xf32>
    %cst_13 = arith.constant 2.000000e-01 : f32
    %18 = vector.broadcast %cst_13 : f32 to vector<8x256xf32>
    %19 = arith.mulf %18, %15 : vector<8x256xf32>
    %20 = arith.select %17, %15, %19 : vector<8x256xi1>, vector<8x256xf32>
    %c0_14 = arith.constant 0 : index
    %c0_15 = arith.constant 0 : index
    %21 = vector.load %arg6[%c0_14, %c0_15] : memref<8x1xf32, #tpu.memory_space<vmem>>, vector<8x1xf32>
    %22 = vector.broadcast %21 : vector<8x1xf32> to vector<8x256xf32>
    %23 = arith.mulf %22, %20 : vector<8x256xf32>
    %cst_16 = arith.constant dense<0.000000e+00> : vector<256xf32>
    %24 = vector.multi_reduction <add>, %23, %cst_16 [0] : vector<8x256xf32> to vector<256xf32>
    %25 = vector.shape_cast %24 : vector<256xf32> to vector<1x256xf32>
    %c0_17 = arith.constant 0 : index
    %26 = memref.load %arg7[%c0_17] : memref<1xf32, #tpu.memory_space<smem>>
    %27 = vector.broadcast %26 : f32 to vector<1x256xf32>
    %28 = arith.addf %25, %27 : vector<1x256xf32>
    %c0_18 = arith.constant 0 : index
    %c0_19 = arith.constant 0 : index
    %29 = vector.load %arg8[%c0_18, %c0_19] : memref<1x256xf32, #tpu.memory_space<vmem>>, vector<1x256xf32>
    tpu.vector_store %arg8[%c0_18, %c0_19], %28 {strides = array<i32>} : memref<1x256xf32, #tpu.memory_space<vmem>>, vector<1x256xf32>,
    return
  }
  func.func @transform_0(%arg0: i32) -> (i32, i32) {
    %c0_i32 = arith.constant 0 : i32
    %c0_i32_0 = arith.constant 0 : i32
    return %c0_i32, %arg0 : i32, i32
  }
  func.func @transform_1(%arg0: i32) -> (i32, i32) {
    %c0_i32 = arith.constant 0 : i32
    %c0_i32_0 = arith.constant 0 : i32
    %c0_i32_1 = arith.constant 0 : i32
    return %c0_i32, %c0_i32_0 : i32, i32
  }
  func.func @transform_2(%arg0: i32) -> (i32, i32) {
    %c0_i32 = arith.constant 0 : i32
    %c0_i32_0 = arith.constant 0 : i32
    %c0_i32_1 = arith.constant 0 : i32
    return %c0_i32, %c0_i32_0 : i32, i32
  }
  func.func @transform_3(%arg0: i32) -> (i32, i32) {
    %c0_i32 = arith.constant 0 : i32
    %c0_i32_0 = arith.constant 0 : i32
    %c0_i32_1 = arith.constant 0 : i32
    return %c0_i32, %c0_i32_0 : i32, i32
  }
  func.func @transform_4(%arg0: i32) -> (i32, i32) {
    %c0_i32 = arith.constant 0 : i32
    %c0_i32_0 = arith.constant 0 : i32
    %c0_i32_1 = arith.constant 0 : i32
    return %c0_i32, %c0_i32_0 : i32, i32
  }
  func.func @transform_5(%arg0: i32) -> (i32, i32) {
    %c0_i32 = arith.constant 0 : i32
    %c0_i32_0 = arith.constant 0 : i32
    %c0_i32_1 = arith.constant 0 : i32
    return %c0_i32, %c0_i32_0 : i32, i32
  }
  func.func @transform_6(%arg0: i32) -> i32 {
    %c0_i32 = arith.constant 0 : i32
    %c0_i32_0 = arith.constant 0 : i32
    return %c0_i32 : i32
  }
  func.func @transform_7(%arg0: i32) -> (i32, i32) {
    %c0_i32 = arith.constant 0 : i32
    %c0_i32_0 = arith.constant 0 : i32
    return %c0_i32, %arg0 : i32, i32
  }
}

</mosaic_0001>

<llo_original>
// kernel: tpu_custom_call.1
$region0: #{tpu_custom_call.1}
  #allocation0 [shape = 'u32[]', space=smem, size = 0x4, offset = 0x4, fixed_abs, tag = 'smem constant byte address 0x4 - core index']
  #allocation1 [shape = 'u32[144,128]{1,0:T(1,128)}', space=vmem, size = 0x12000, scoped, tag = 'internal scratch']
  #allocation2 [shape = 'f32[1]{0:T(128)S(6)}', space=smem, size = 0x200, scoped, tag = 'scoped memory for tpu_custom_call.1']
  %s0 = inlined_call_operand.vmem [shape: f32[4,256], index: 0, kind: input, shape index: {}]
  %s1 = inlined_call_operand.vmem [shape: f32[16,4], index: 1, kind: input, shape index: {}]
  %s2 = inlined_call_operand.vmem [shape: f32[16,1], index: 2, kind: input, shape index: {}]
  %s3 = inlined_call_operand.vmem [shape: f32[8,16], index: 3, kind: input, shape index: {}]
  %s4 = inlined_call_operand.vmem [shape: f32[8,1], index: 4, kind: input, shape index: {}]
  %s5 = inlined_call_operand.vmem [shape: f32[8,1], index: 5, kind: input, shape index: {}]
  %s6 = inlined_call_operand.<no memory space> [shape: f32[1], index: 6, kind: input, shape index: {}]
  %s7 = inlined_call_operand.hbm [shape: f32[1,256], index: 7, kind: output, shape index: {}]
  %s8 = sld [smem:[#allocation0]]
  $region38: #{tpu_custom_call.1} parent=0
    _
  %s10 = ssub.s32 1, %s8
  %s11 = scalar_select 0, %s10, %s8
  %12 = sst [smem:[#allocation2]] %s6
  $region1: #{tpu_custom_call.1} parent=0
    #allocation3 [shape = 'u8[1024]{0}', space=vmem, size = 0x400, scoped, tag = 'output window, operand 0, single buffered']
    #allocation4 [shape = 's32[1]{0}', space=sflag, size = 0x4, scoped, tag = 'scoped memory for tpu_custom_call.1']
    %13 = vsyncpa [#allocation4], 0
    // Predicated region
    $region2: #{tpu_custom_call.1} parent=1 // pred_check
      _
    $region3: #{tpu_custom_call.1} parent=1 // pred_check_branch
      %15 = sbr.rel (0) target = $region5
    $region4: #{tpu_custom_call.1} parent=1 // pred_region
      _
    $region5: #{tpu_custom_call.1} parent=1 // pred_fallthru
      _
    // Predicated region
    $region6: #{tpu_custom_call.1} parent=1 // pred_check
      _
    $region7: #{tpu_custom_call.1} parent=1 // pred_check_branch
      %17 = sbr.rel (0) target = $region9
    $region8: #{tpu_custom_call.1} parent=1 // pred_region
      _
    $region9: #{tpu_custom_call.1} parent=1 // pred_fallthru
      _
    // Predicated region
    $region10: #{tpu_custom_call.1} parent=1 // pred_check
      _
    $region11: #{tpu_custom_call.1} parent=1 // pred_check_branch
      %19 = sbr.rel (0) target = $region13
    $region12: #{tpu_custom_call.1} parent=1 // pred_region
      _
    $region13: #{tpu_custom_call.1} parent=1 // pred_fallthru
      _
    // Predicated region
    $region14: #{tpu_custom_call.1} parent=1 // pred_check
      _
    $region15: #{tpu_custom_call.1} parent=1 // pred_check_branch
      %21 = sbr.rel (0) target = $region17
    $region16: #{tpu_custom_call.1} parent=1 // pred_region
      _
    $region17: #{tpu_custom_call.1} parent=1 // pred_fallthru
      _
    // Predicated region
    $region18: #{tpu_custom_call.1} parent=1 // pred_check
      _
    $region19: #{tpu_custom_call.1} parent=1 // pred_check_branch
      %23 = sbr.rel (0) target = $region21
    $region20: #{tpu_custom_call.1} parent=1 // pred_region
      _
    $region21: #{tpu_custom_call.1} parent=1 // pred_fallthru
      _
    // Predicated region
    $region22: #{tpu_custom_call.1} parent=1 // pred_check
      _
    $region23: #{tpu_custom_call.1} parent=1 // pred_check_branch
      %25 = sbr.rel (0) target = $region25
    $region24: #{tpu_custom_call.1} parent=1 // pred_region
      _
    $region25: #{tpu_custom_call.1} parent=1 // pred_fallthru
      _
    // Predicated region
    $region26: #{tpu_custom_call.1} parent=1 // pred_check
      _
    $region27: #{tpu_custom_call.1} parent=1 // pred_check_branch
      %27 = sbr.rel (0) target = $region29
    $region28: #{tpu_custom_call.1} parent=1 // pred_region
      _
    $region29: #{tpu_custom_call.1} parent=1 // pred_fallthru
      _
    %v28 = vld [vmem:[%s0] sm:$0xff]
    %v29 = vld [vmem:[%s1] sm:$0xff]
    %v30 = vld [vmem:[%s1 + $0x8] sm:$0xff]
    %v31 = vld [vmem:[%s2] sm:$0xff]
    %v32 = vld [vmem:[%s2 + $0x8] sm:$0xff]
    %34 = vset.pattern.permute.xlu0 0
    %35 = vperm.xlu0 %34, %v31
    %v36 = vpop.permute.xlu0 %35
    %39 = vset.pattern.permute.xlu0 0
    %40 = vperm.xlu0 %39, %v32
    %v41 = vpop.permute.xlu0 %40
    %v44 = vcombine.high %v28, %v28
    %vm45 = vcmask 31744
    %v47 = vsel %vm45, %v29, 0
    %v50 = vsel %vm45, %v30, 0
    %vm52 = vcmask 1043456
    %v53 = vsel %vm52, %v28, 0
    %v55 = vsel %vm52, %v44, 0
    %57 = vmatprep.subr.mxu0 0.0
    %58 = vmatpush1.msra.mxu0 0.0
    %59 = vmatprep.subr.mxu0 0.0
    %60 = vmatpush1.msra.mxu0 0.0
    %61 = vmatprep.subr.mxu0 0.0
    %62 = vmatpush1.msra.mxu0 0.0
    %63 = vmatprep.subr.mxu0 0.0
    %64 = vmatpush1.msra.mxu0 0.0
    %65 = vmatprep.subr.mxu0 0.0
    %66 = vmatpush1.msra.mxu0 0.0
    %67 = vmatprep.subr.mxu0 0.0
    %68 = vmatpush1.msra.mxu0 0.0
    %69 = vmatprep.subr.mxu0 0.0
    %70 = vmatpush1.msra.mxu0 0.0
    %71 = vmatprep.subr.mxu0 0.0
    %72 = vmatpush1.msra.mxu0 0.0
    %73 = vmatprep.subr.mxu0 0.0
    %74 = vmatpush1.msra.mxu0 0.0
    %75 = vmatprep.subr.mxu0 0.0
    %76 = vmatpush1.msra.mxu0 0.0
    %77 = vmatprep.subr.mxu0 0.0
    %78 = vmatpush1.msra.mxu0 0.0
    %79 = vmatprep.subr.mxu0 0.0
    %80 = vmatpush1.msra.mxu0 0.0
    %81 = vmatprep.subr.mxu0 0.0
    %82 = vmatpush1.msra.mxu0 0.0
    %83 = vmatprep.subr.mxu0 0.0
    %84 = vmatpush1.msra.mxu0 0.0
    %85 = vmatprep.subr.mxu0 0.0
    %86 = vmatpush1.msra.mxu0 0.0
    %87 = vmatprep.subr.mxu0 %v55
    %88 = vmatpush1.msra.mxu0 %v53
    %89 = vmatprep.subr.mxu0 0.0
    %90 = vmatpush2.msra.mxu0 0.0
    %91 = vmatprep.subr.mxu0 0.0
    %92 = vmatpush2.msra.mxu0 0.0
    %93 = vmatprep.subr.mxu0 0.0
    %94 = vmatpush2.msra.mxu0 0.0
    %95 = vmatprep.subr.mxu0 0.0
    %96 = vmatpush2.msra.mxu0 0.0
    %97 = vmatprep.subr.mxu0 0.0
    %98 = vmatpush2.msra.mxu0 0.0
    %99 = vmatprep.subr.mxu0 0.0
    %100 = vmatpush2.msra.mxu0 0.0
    %101 = vmatprep.subr.mxu0 0.0
    %102 = vmatpush2.msra.mxu0 0.0
    %103 = vmatprep.subr.mxu0 0.0
    %104 = vmatpush2.msra.mxu0 0.0
    %105 = vmatprep.subr.mxu0 0.0
    %106 = vmatpush2.msra.mxu0 0.0
    %107 = vmatprep.subr.mxu0 0.0
    %108 = vmatpush2.msra.mxu0 0.0
    %109 = vmatprep.subr.mxu0 0.0
    %110 = vmatpush2.msra.mxu0 0.0
    %111 = vmatprep.subr.mxu0 0.0
    %112 = vmatpush2.msra.mxu0 0.0
    %113 = vmatprep.subr.mxu0 0.0
    %114 = vmatpush2.msra.mxu0 0.0
    %115 = vmatprep.subr.mxu0 0.0
    %116 = vmatpush2.msra.mxu0 0.0
    %117 = vmatprep.subr.mxu0 0.0
    %118 = vmatpush2.msra.mxu0 0.0
    %119 = vmatprep.subr.mxu0 0.0
    %120 = vmatpush2.msra.mxu0 0.0
    %121 = vmatprep.mubr.f32.mxu0 0.0
    %122 = vmatmul.mubr.f32.gmra.mxu0 %v47
    %v123 = vpop.f32.mrf.mxu0
    %v124 = vadd.f32 %v36, %v123
    %v125 = vpop.f32.mrf.mxu0
    %v126 = vadd.f32 %v36, %v125
    %127 = vmatprep.mubr.f32.mxu0 0.0
    %128 = vmatmul.mubr.f32.gmra.mxu0 %v50
    %v129 = vpop.f32.mrf.mxu0
    %v130 = vadd.f32 %v41, %v129
    %v131 = vpop.f32.mrf.mxu0
    %v132 = vadd.f32 %v41, %v131
    %133 = vdwg.mxu0
    %vm134 = vcmp.ge.f32.partialorder %v124, 0.0
    %vm135 = vcmp.ge.f32.partialorder %v126, 0.0
    %vm136 = vcmp.ge.f32.partialorder %v130, 0.0
    %vm137 = vcmp.ge.f32.partialorder %v132, 0.0
    %v138 = vmul.f32 %v124, 0.2
    %v139 = vmul.f32 %v126, 0.2
    %v140 = vmul.f32 %v130, 0.2
    %v141 = vmul.f32 %v132, 0.2
    %v142 = vsel %vm134, %v124, %v138
    %v143 = vsel %vm135, %v126, %v139
    %v144 = vsel %vm136, %v130, %v140
    %v145 = vsel %vm137, %v132, %v141
    %v146 = vld [vmem:[%s3] sm:$0xff]
    %v147 = vld [vmem:[%s4] sm:$0xff]
    %149 = vset.pattern.permute.xlu0 0
    %150 = vperm.xlu0 %149, %v147
    %v151 = vpop.permute.xlu0 %150
    %vm153 = vcmask 130048
    %v155 = vsel %vm153, %v146, 0
    %157 = vmatprep.subr.mxu0 0.0
    %158 = vmatpush1.msra.mxu0 0.0
    %159 = vmatprep.subr.mxu0 0.0
    %160 = vmatpush1.msra.mxu0 0.0
    %161 = vmatprep.subr.mxu0 0.0
    %162 = vmatpush1.msra.mxu0 0.0
    %163 = vmatprep.subr.mxu0 0.0
    %164 = vmatpush1.msra.mxu0 0.0
    %165 = vmatprep.subr.mxu0 0.0
    %166 = vmatpush1.msra.mxu0 0.0
    %167 = vmatprep.subr.mxu0 0.0
    %168 = vmatpush1.msra.mxu0 0.0
    %169 = vmatprep.subr.mxu0 0.0
    %170 = vmatpush1.msra.mxu0 0.0
    %171 = vmatprep.subr.mxu0 0.0
    %172 = vmatpush1.msra.mxu0 0.0
    %173 = vmatprep.subr.mxu0 0.0
    %174 = vmatpush1.msra.mxu0 0.0
    %175 = vmatprep.subr.mxu0 0.0
    %176 = vmatpush1.msra.mxu0 0.0
    %177 = vmatprep.subr.mxu0 0.0
    %178 = vmatpush1.msra.mxu0 0.0
    %179 = vmatprep.subr.mxu0 0.0
    %180 = vmatpush1.msra.mxu0 0.0
    %181 = vmatprep.subr.mxu0 0.0
    %182 = vmatpush1.msra.mxu0 0.0
    %183 = vmatprep.subr.mxu0 0.0
    %184 = vmatpush1.msra.mxu0 0.0
    %185 = vmatprep.subr.mxu0 %v145
    %186 = vmatpush1.msra.mxu0 %v144
    %187 = vmatprep.subr.mxu0 %v143
    %188 = vmatpush1.msra.mxu0 %v142
    %189 = vmatprep.subr.mxu0 0.0
    %190 = vmatpush2.msra.mxu0 0.0
    %191 = vmatprep.subr.mxu0 0.0
    %192 = vmatpush2.msra.mxu0 0.0
    %193 = vmatprep.subr.mxu0 0.0
    %194 = vmatpush2.msra.mxu0 0.0
    %195 = vmatprep.subr.mxu0 0.0
    %196 = vmatpush2.msra.mxu0 0.0
    %197 = vmatprep.subr.mxu0 0.0
    %198 = vmatpush2.msra.mxu0 0.0
    %199 = vmatprep.subr.mxu0 0.0
    %200 = vmatpush2.msra.mxu0 0.0
    %201 = vmatprep.subr.mxu0 0.0
    %202 = vmatpush2.msra.mxu0 0.0
    %203 = vmatprep.subr.mxu0 0.0
    %204 = vmatpush2.msra.mxu0 0.0
    %205 = vmatprep.subr.mxu0 0.0
    %206 = vmatpush2.msra.mxu0 0.0
    %207 = vmatprep.subr.mxu0 0.0
    %208 = vmatpush2.msra.mxu0 0.0
    %209 = vmatprep.subr.mxu0 0.0
    %210 = vmatpush2.msra.mxu0 0.0
    %211 = vmatprep.subr.mxu0 0.0
    %212 = vmatpush2.msra.mxu0 0.0
    %213 = vmatprep.subr.mxu0 0.0
    %214 = vmatpush2.msra.mxu0 0.0
    %215 = vmatprep.subr.mxu0 0.0
    %216 = vmatpush2.msra.mxu0 0.0
    %217 = vmatprep.subr.mxu0 0.0
    %218 = vmatpush2.msra.mxu0 0.0
    %219 = vmatprep.subr.mxu0 0.0
    %220 = vmatpush2.msra.mxu0 0.0
    %221 = vmatprep.mubr.f32.mxu0 0.0
    %222 = vmatmul.mubr.f32.gmra.mxu0 %v155
    %v223 = vpop.f32.mrf.mxu0
    %v224 = vadd.f32 %v151, %v223
    %v225 = vpop.f32.mrf.mxu0
    %v226 = vadd.f32 %v151, %v225
    %227 = vdwg.mxu0
    %vm228 = vcmp.ge.f32.partialorder %v224, 0.0
    %vm229 = vcmp.ge.f32.partialorder %v226, 0.0
    %v230 = vmul.f32 %v224, 0.2
    %v231 = vmul.f32 %v226, 0.2
    %v232 = vsel %vm228, %v224, %v230
    %v233 = vsel %vm229, %v226, %v231
    %v234 = vld [vmem:[%s5] sm:$0xff]
    %236 = vset.pattern.permute.xlu0 0
    %237 = vperm.xlu0 %236, %v234
    %v238 = vpop.permute.xlu0 %237
    %v240 = vmul.f32 %v238, %v232
    %v241 = vmul.f32 %v238, %v233
    %v242 = vrot.slane %v240, 4
    %v243 = vadd.f32 %v240, %v242
    %v244 = vrot.slane %v243, 2
    %v245 = vadd.f32 %v243, %v244
    %v246 = vrot.slane %v245, 1
    %v247 = vadd.f32 %v245, %v246
    %v248 = vrot.slane %v241, 4
    %v249 = vadd.f32 %v241, %v248
    %v250 = vrot.slane %v249, 2
    %v251 = vadd.f32 %v249, %v250
    %v252 = vrot.slane %v251, 1
    %v253 = vadd.f32 %v251, %v252
    %s254 = sld [smem:[#allocation2]]
    %v255 = vstv %s254
    %v256 = vadd.f32 %v247, %v255
    %v257 = vadd.f32 %v253, %v255
    %v260 = vcombine.low %v256, %v257
    %v262 = vunpack.c.l.s4 1966171168
    %v263 = vunpack.c.0.s8 %v262
    %v264 = vlaneseq
    %v265 = vshrl.u32 %v264, 7
    %v266 = vsub.s32 %v263, %v265
    %v267 = vrot.slane %v260, %v266
    %v269 = vunpack.c.l.s4 1966171168
    %v270 = vunpack.c.0.s8 %v269
    %v271 = vlaneseq
    %v272 = vshrl.u32 %v271, 7
    %v273 = vsub.s32 %v270, %v272
    %v274 = vrot.slane %v267, %v273
    %v276 = vlaneseq
    %vm277 = vcmp.ge.s32.totalorder %v276, 0
    %vm278 = vcmp.lt.s32.totalorder %v276, 256
    %vm279 = vmand %vm277, %vm278
    %280 = vst.msk [vmem:[#allocation3] sm:$0x3] %vm279, %v274
    // Predicated region
    $region30: #{tpu_custom_call.1} parent=1 // pred_check
      _
    $region31: #{tpu_custom_call.1} parent=1 // pred_check_branch
      %282 = sbr.rel (0) target = $region33
    $region32: #{tpu_custom_call.1} parent=1 // pred_region
      %s284 = ssub.s32 32, 32
      %285 = vsyncadd [#allocation4], %s284
      %s287 = sshll.u32 [#allocation3], 4
      %s288 = int_to_ptr.vmem [resolvable:$true] %s287
      %290 = dma.vmem_to_hbm [thread:$0]  %s288, 32, %s7, [#allocation4]
    $region33: #{tpu_custom_call.1} parent=1 // pred_fallthru
      _
    // Predicated region
    $region34: #{tpu_custom_call.1} parent=1 // pred_check
      _
    $region35: #{tpu_custom_call.1} parent=1 // pred_check_branch
      %292 = sbr.rel (0) target = $region37
    $region36: #{tpu_custom_call.1} parent=1 // pred_region
      %293 = dma.done [#allocation4], 32
    $region37: #{tpu_custom_call.1} parent=1 // pred_fallthru
      _
    %294 = vsyncpa [#allocation4], 1

</llo_original>
